<compile_context>
chip_gen: v5e
topology: v5e:2x2
jax: 0.10.0
libtpu: 0.0.40
codegen_flags: <defaults>
</compile_context>

<pallas_src>
import functools

import jax
import jax.numpy as jnp
from jax import lax
from jax.experimental import pallas as pl
from jax.experimental.pallas import tpu as pltpu


# --------------------------------------------------------------------------
# Fused ResidualUnit kernel (one batch element per grid step).
# --------------------------------------------------------------------------
def _residual_unit_kernel(x_ref, row_ref, col_ref, w1_ref, b1_ref, w2_ref,
                          b2_ref, w3_ref, b3_ref, o_ref, *, H, W):
    # x_ref : (1, Cio, H*W)        input, spatial flattened onto lanes
    # row_ref/col_ref : (1, H*W)   spatial row / column index per lane
    # w1_ref: (CP, Cio)  b1_ref: (CP, 1)        (CP = Cmid padded to mult. of 8)
    # w2_ref: (Cmid, 9*CP)  b2_ref: (Cmid, 1)   im2col weight for the 3x3 conv
    # w3_ref: (Cio, Cmid)   b3_ref: (Cio, 1)
    # o_ref : (1, Cio, H*W)
    cp = w1_ref.shape[0]
    HW = H * W

    x = x_ref[0]                                        # (Cio, HW), lane-dense

    # ---- conv1 (1x1) + bias + ReLU : one MXU matmul --------------------
    h1 = jnp.dot(w1_ref[...], x, preferred_element_type=jnp.float32)
    h1 = jnp.maximum(h1 + b1_ref[...], 0.0)             # (CP, HW); pad rows = 0

    # ---- conv2 (3x3, pad=1) as ONE im2col matmul, K = 9*CP -------------
    # Shifted taps via lane rotations (XLU) + boundary masks; padding of the
    # intermediate is handled entirely by the masks (no pads, no reshapes).
    row = jnp.broadcast_to(row_ref[...], (cp, HW))
    col = jnp.broadcast_to(col_ref[...], (cp, HW))
    top_ok = row >= 1
    bot_ok = row <= H - 2
    left_ok = col >= 1
    right_ok = col <= W - 2

    taps = []
    for dy in (-1, 0, 1):
        for dx in (-1, 0, 1):
            shift = dy * W + dx                         # flat spatial offset
            t = h1 if shift == 0 else pltpu.roll(h1, (-shift) % HW, axis=1)
            conds = []
            if dy == -1:
                conds.append(top_ok)
            if dy == 1:
                conds.append(bot_ok)
            if dx == -1:
                conds.append(left_ok)
            if dx == 1:
                conds.append(right_ok)
            if conds:
                m = conds[0]
                for c in conds[1:]:
                    m = jnp.logical_and(m, c)
                t = jnp.where(m, t, 0.0)
            taps.append(t)
    # Each tap is (CP, HW) with CP a multiple of 8 -> sublane-aligned concat.
    patches = jnp.concatenate(taps, axis=0)             # (9*CP, HW)

    h2 = jnp.dot(w2_ref[...], patches, preferred_element_type=jnp.float32)
    h2 = jnp.maximum(h2 + b2_ref[...], 0.0)             # (Cmid, HW)

    # ---- conv3 (1x1) + bias + residual + ReLU ---------------------------
    h3 = jnp.dot(w3_ref[...], h2, preferred_element_type=jnp.float32)
    out = jnp.maximum(h3 + b3_ref[...] + x, 0.0)        # (Cio, HW)
    o_ref[0] = out.astype(o_ref.dtype)


def residual_unit_pallas(x_nchw, w1, b1, w2, b2, w3, b3):
    """x_nchw: (N, Cio, H, W); w1: (Cmid, Cio, 1, 1); w2: (Cmid, Cmid, 3, 3);
    w3: (Cio, Cmid, 1, 1)."""
    N, c_io, H, W = x_nchw.shape
    c_mid = w1.shape[0]
    HW = H * W
    cp = ((c_mid + 7) // 8) * 8      # pad conv1 out-ch to a full f32 sublane grp

    # Free row-major reshape: NCHW -> (N, Cio, H*W); spatial maps to lanes.
    x2 = x_nchw.reshape(N, c_io, HW)

    # conv1 weight/bias, zero-padded to cp rows (ReLU(0)=0, so pad rows stay 0).
    w1m = jnp.zeros((cp, c_io), jnp.float32).at[:c_mid].set(w1.reshape(c_mid, c_io))
    b1c = jnp.zeros((cp, 1), jnp.float32).at[:c_mid, 0].set(b1)

    # conv2 weight as a single im2col matrix (Cmid, 9*cp).  Column order is
    # tap-major (t = (dy+1)*3 + (dx+1)), in-channel minor, matching the
    # in-kernel concat of the 9 shifted taps; padded in-channel cols are zero.
    w2p = jnp.zeros((c_mid, cp, 3, 3), jnp.float32).at[:, :c_mid].set(w2)
    w2m = jnp.transpose(w2p, (0, 2, 3, 1)).reshape(c_mid, 9 * cp)
    b2c = b2.reshape(c_mid, 1)

    w3m = w3.reshape(c_io, c_mid)
    b3c = b3.reshape(c_io, 1)

    # Flattened-spatial row / column indices, used for in-kernel halo masking.
    row_ids = jnp.repeat(jnp.arange(H, dtype=jnp.int32), W).reshape(1, HW)
    col_ids = jnp.tile(jnp.arange(W, dtype=jnp.int32), H).reshape(1, HW)

    kernel = functools.partial(_residual_unit_kernel, H=H, W=W)
    out = pl.pallas_call(
        kernel,
        out_shape=jax.ShapeDtypeStruct((N, c_io, HW), x_nchw.dtype),
        grid=(N,),
        in_specs=[
            pl.BlockSpec((1, c_io, HW), lambda n: (n, 0, 0)),
            pl.BlockSpec((1, HW), lambda n: (0, 0)),
            pl.BlockSpec((1, HW), lambda n: (0, 0)),
            pl.BlockSpec((cp, c_io), lambda n: (0, 0)),
            pl.BlockSpec((cp, 1), lambda n: (0, 0)),
            pl.BlockSpec((c_mid, 9 * cp), lambda n: (0, 0)),
            pl.BlockSpec((c_mid, 1), lambda n: (0, 0)),
            pl.BlockSpec((c_io, c_mid), lambda n: (0, 0)),
            pl.BlockSpec((c_io, 1), lambda n: (0, 0)),
        ],
        out_specs=pl.BlockSpec((1, c_io, HW), lambda n: (n, 0, 0)),
        compiler_params=pltpu.CompilerParams(
            dimension_semantics=("parallel",)),
    )(x2, row_ids, col_ids, w1m, b1c, w2m, b2c, w3m, b3c)
    return out.reshape(N, c_io, H, W)


# --------------------------------------------------------------------------
# Module-level wrapper reproducing ResidualUnit.forward (conv_slide slicing)
# --------------------------------------------------------------------------
def init_residual_unit_params(key, io_ch, mid_ch):
    ks = jax.random.split(key, 6)

    def conv_init(kw, kb, cout, cin, ksize):
        bound = float((cin * ksize * ksize) ** -0.5)
        w = jax.random.uniform(kw, (cout, cin, ksize, ksize), jnp.float32,
                               -bound, bound)
        b = jax.random.uniform(kb, (cout,), jnp.float32, -bound, bound)
        return w, b

    w1, b1 = conv_init(ks[0], ks[1], mid_ch, io_ch, 1)
    w2, b2 = conv_init(ks[2], ks[3], mid_ch, mid_ch, 3)
    w3, b3 = conv_init(ks[4], ks[5], io_ch, mid_ch, 1)
    return {"conv1": {"weight": w1, "bias": b1},
            "conv2": {"weight": w2, "bias": b2},
            "conv3": {"weight": w3, "bias": b3}}


def _slice_params(params, *, io_ch_start, io_ch_end, mid_ch_start, mid_ch_end,
                  index_channel):
    io_s, io_e = io_ch_start[index_channel], io_ch_end[index_channel]
    md_s, md_e = mid_ch_start[index_channel], mid_ch_end[index_channel]
    w1 = params["conv1"]["weight"][md_s:md_e, io_s:io_e, :, :]
    b1 = params["conv1"]["bias"][md_s:md_e]
    w2 = params["conv2"]["weight"][md_s:md_e, md_s:md_e, :, :]
    b2 = params["conv2"]["bias"][md_s:md_e]
    w3 = params["conv3"]["weight"][io_s:io_e, md_s:md_e, :, :]
    b3 = params["conv3"]["bias"][io_s:io_e]
    return w1, b1, w2, b2, w3, b3


def residual_unit_forward(params, x_nchw, *, io_ch_start, io_ch_end,
                          mid_ch_start, mid_ch_end, index_channel=0):
    w1, b1, w2, b2, w3, b3 = _slice_params(
        params, io_ch_start=io_ch_start, io_ch_end=io_ch_end,
        mid_ch_start=mid_ch_start, mid_ch_end=mid_ch_end,
        index_channel=index_channel)
    return residual_unit_pallas(x_nchw, w1, b1, w2, b2, w3, b3)


# --------------------------------------------------------------------------
# Pure-JAX reference (for correctness check)
# --------------------------------------------------------------------------
def _reference_forward(params, x_nchw, *, io_ch_start, io_ch_end,
                       mid_ch_start, mid_ch_end, index_channel=0):
    w1, b1, w2, b2, w3, b3 = _slice_params(
        params, io_ch_start=io_ch_start, io_ch_end=io_ch_end,
        mid_ch_start=mid_ch_start, mid_ch_end=mid_ch_end,
        index_channel=index_channel)

    def conv(x, w, b, pad):
        y = lax.conv_general_dilated(
            x, w, window_strides=(1, 1), padding=((pad, pad), (pad, pad)),
            dimension_numbers=("NCHW", "OIHW", "NCHW"))
        return y + b[None, :, None, None]

    h = jnp.maximum(conv(x_nchw, w1, b1, 0), 0.0)
    h = jnp.maximum(conv(h, w2, b2, 1), 0.0)
    h = conv(h, w3, b3, 0)
    return jnp.maximum(h + x_nchw, 0.0)


if __name__ == "__main__":
    key = jax.random.PRNGKey(0)
    k_param, k_x = jax.random.split(key)

    # Module config (small, deterministic).
    io_ch, mid_ch = 4, 4
    io_ch_start, io_ch_end = [0, 0], [3, 4]
    mid_ch_start, mid_ch_end = [0, 0], [3, 4]
    index_channel = 0

    params = init_residual_unit_params(k_param, io_ch, mid_ch)

    # Input uses the sliced io-channel count for index_channel=0 (the PyTorch
    # module convolves with weight[:, io_start:io_end] and adds the identity).
    N, H, W = 2, 16, 16
    c_io = io_ch_end[index_channel] - io_ch_start[index_channel]
    x = jax.random.normal(k_x, (N, c_io, H, W), jnp.float32)

    cfg = dict(io_ch_start=io_ch_start, io_ch_end=io_ch_end,
               mid_ch_start=mid_ch_start, mid_ch_end=mid_ch_end,
               index_channel=index_channel)
    fwd = functools.partial(residual_unit_forward, **cfg)
    ref = functools.partial(_reference_forward, **cfg)

    y = jax.block_until_ready(fwd(params, x))
    y_ref = jax.block_until_ready(ref(params, x))

    assert y.shape == (N, c_io, H, W), y.shape
    assert jnp.allclose(y, y_ref, atol=1e-4, rtol=1e-4), \
        float(jnp.max(jnp.abs(y - y_ref)))

    print("KERNEL_OK")
</pallas_src>

<mosaic_0001>
module attributes {stable_mosaic.version = 11 : i64} {
  func.func @_residual_unit_kernel(%arg0: i32, %arg1: memref<1x3x256xf32, #tpu.memory_space<vmem>>, %arg2: memref<1x256xi32, #tpu.memory_space<vmem>>, %arg3: memref<1x256xi32, #tpu.memory_space<vmem>>, %arg4: memref<8x3xf32, #tpu.memory_space<vmem>>, %arg5: memref<8x1xf32, #tpu.memory_space<vmem>>, %arg6: memref<3x72xf32, #tpu.memory_space<vmem>>, %arg7: memref<3x1xf32, #tpu.memory_space<vmem>>, %arg8: memref<3x3xf32, #tpu.memory_space<vmem>>, %arg9: memref<3x1xf32, #tpu.memory_space<vmem>>, %arg10: memref<1x3x256xf32, #tpu.memory_space<vmem>>) attributes {dimension_semantics = [#tpu.dimension_semantics<parallel>], iteration_bounds = array<i64: 2>, scalar_prefetch = 0 : i64, scratch_operands = 0 : i64, tpu.core_type = #tpu.core_type<tc>, window_params = [{transform_indices = @transform_0, window_bounds = array<i64: 1, 3, 256>}, {pipeline_mode = #tpu.pipeline_mode<synchronous>, transform_indices = @transform_1, window_bounds = array<i64: 1, 256>}, {pipeline_mode = #tpu.pipeline_mode<synchronous>, transform_indices = @transform_2, window_bounds = array<i64: 1, 256>}, {pipeline_mode = #tpu.pipeline_mode<synchronous>, transform_indices = @transform_3, window_bounds = array<i64: 8, 3>}, {pipeline_mode = #tpu.pipeline_mode<synchronous>, transform_indices = @transform_4, window_bounds = array<i64: 8, 1>}, {pipeline_mode = #tpu.pipeline_mode<synchronous>, transform_indices = @transform_5, window_bounds = array<i64: 3, 72>}, {pipeline_mode = #tpu.pipeline_mode<synchronous>, transform_indices = @transform_6, window_bounds = array<i64: 3, 1>}, {pipeline_mode = #tpu.pipeline_mode<synchronous>, transform_indices = @transform_7, window_bounds = array<i64: 3, 3>}, {pipeline_mode = #tpu.pipeline_mode<synchronous>, transform_indices = @transform_8, window_bounds = array<i64: 3, 1>}, {transform_indices = @transform_9, window_bounds = array<i64: 1, 3, 256>}]} {
    %c0 = arith.constant 0 : index
    %c0_0 = arith.constant 0 : index
    %c0_1 = arith.constant 0 : index
    %0 = vector.load %arg1[%c0, %c0_0, %c0_1] : memref<1x3x256xf32, #tpu.memory_space<vmem>>, vector<1x3x256xf32>
    %1 = vector.shape_cast %0 : vector<1x3x256xf32> to vector<3x256xf32>
    %c0_2 = arith.constant 0 : index
    %c0_3 = arith.constant 0 : index
    %2 = vector.load %arg4[%c0_2, %c0_3] : memref<8x3xf32, #tpu.memory_space<vmem>>, vector<8x3xf32>
    %cst = arith.constant dense<0.000000e+00> : vector<8x256xf32>
    %3 = tpu.matmul %2, %1, %cst {dimension_numbers = #tpu.dot_dimension_numbers<[1], [0], [0], [1], [0, 0, 1, 1], [], []>} : vector<8x3xf32>, vector<3x256xf32>, vector<8x256xf32> -> vector<8x256xf32>
    %c0_4 = arith.constant 0 : index
    %c0_5 = arith.constant 0 : index
    %4 = vector.load %arg5[%c0_4, %c0_5] : memref<8x1xf32, #tpu.memory_space<vmem>>, vector<8x1xf32>
    %5 = vector.broadcast %4 : vector<8x1xf32> to vector<8x256xf32>
    %6 = arith.addf %3, %5 : vector<8x256xf32>
    %cst_6 = arith.constant 0.000000e+00 : f32
    %7 = vector.broadcast %cst_6 : f32 to vector<8x256xf32>
    %8 = arith.maximumf %6, %7 : vector<8x256xf32>
    %c0_7 = arith.constant 0 : index
    %c0_8 = arith.constant 0 : index
    %9 = vector.load %arg2[%c0_7, %c0_8] : memref<1x256xi32, #tpu.memory_space<vmem>>, vector<1x256xi32>
    %10 = vector.shape_cast %9 : vector<1x256xi32> to vector<1x256xi32>
    %11 = vector.broadcast %10 : vector<1x256xi32> to vector<8x256xi32>
    %c0_9 = arith.constant 0 : index
    %c0_10 = arith.constant 0 : index
    %12 = vector.load %arg3[%c0_9, %c0_10] : memref<1x256xi32, #tpu.memory_space<vmem>>, vector<1x256xi32>
    %13 = vector.shape_cast %12 : vector<1x256xi32> to vector<1x256xi32>
    %14 = vector.broadcast %13 : vector<1x256xi32> to vector<8x256xi32>
    %c1_i32 = arith.constant 1 : i32
    %15 = vector.broadcast %c1_i32 : i32 to vector<8x256xi32>
    %16 = arith.cmpi sge, %11, %15 : vector<8x256xi32>
    %c14_i32 = arith.constant 14 : i32
    %17 = vector.broadcast %c14_i32 : i32 to vector<8x256xi32>
    %18 = arith.cmpi sle, %11, %17 : vector<8x256xi32>
    %c1_i32_11 = arith.constant 1 : i32
    %19 = vector.broadcast %c1_i32_11 : i32 to vector<8x256xi32>
    %20 = arith.cmpi sge, %14, %19 : vector<8x256xi32>
    %c14_i32_12 = arith.constant 14 : i32
    %21 = vector.broadcast %c14_i32_12 : i32 to vector<8x256xi32>
    %22 = arith.cmpi sle, %14, %21 : vector<8x256xi32>
    %c17_i32 = arith.constant 17 : i32
    %23 = tpu.dynamic_rotate %8 by %c17_i32 dim 1 : vector<8x256xf32>, i32 -> vector<8x256xf32>
    %24 = arith.andi %16, %20 : vector<8x256xi1>
    %cst_13 = arith.constant 0.000000e+00 : f32
    %25 = vector.broadcast %cst_13 : f32 to vector<8x256xf32>
    %26 = arith.select %24, %23, %25 : vector<8x256xi1>, vector<8x256xf32>
    %c16_i32 = arith.constant 16 : i32
    %27 = tpu.dynamic_rotate %8 by %c16_i32 dim 1 : vector<8x256xf32>, i32 -> vector<8x256xf32>
    %cst_14 = arith.constant 0.000000e+00 : f32
    %28 = vector.broadcast %cst_14 : f32 to vector<8x256xf32>
    %29 = arith.select %16, %27, %28 : vector<8x256xi1>, vector<8x256xf32>
    %c15_i32 = arith.constant 15 : i32
    %30 = tpu.dynamic_rotate %8 by %c15_i32 dim 1 : vector<8x256xf32>, i32 -> vector<8x256xf32>
    %31 = arith.andi %16, %22 : vector<8x256xi1>
    %cst_15 = arith.constant 0.000000e+00 : f32
    %32 = vector.broadcast %cst_15 : f32 to vector<8x256xf32>
    %33 = arith.select %31, %30, %32 : vector<8x256xi1>, vector<8x256xf32>
    %c1_i32_16 = arith.constant 1 : i32
    %34 = tpu.dynamic_rotate %8 by %c1_i32_16 dim 1 : vector<8x256xf32>, i32 -> vector<8x256xf32>
    %cst_17 = arith.constant 0.000000e+00 : f32
    %35 = vector.broadcast %cst_17 : f32 to vector<8x256xf32>
    %36 = arith.select %20, %34, %35 : vector<8x256xi1>, vector<8x256xf32>
    %c255_i32 = arith.constant 255 : i32
    %37 = tpu.dynamic_rotate %8 by %c255_i32 dim 1 : vector<8x256xf32>, i32 -> vector<8x256xf32>
    %cst_18 = arith.constant 0.000000e+00 : f32
    %38 = vector.broadcast %cst_18 : f32 to vector<8x256xf32>
    %39 = arith.select %22, %37, %38 : vector<8x256xi1>, vector<8x256xf32>
    %c241_i32 = arith.constant 241 : i32
    %40 = tpu.dynamic_rotate %8 by %c241_i32 dim 1 : vector<8x256xf32>, i32 -> vector<8x256xf32>
    %41 = arith.andi %18, %20 : vector<8x256xi1>
    %cst_19 = arith.constant 0.000000e+00 : f32
    %42 = vector.broadcast %cst_19 : f32 to vector<8x256xf32>
    %43 = arith.select %41, %40, %42 : vector<8x256xi1>, vector<8x256xf32>
    %c240_i32 = arith.constant 240 : i32
    %44 = tpu.dynamic_rotate %8 by %c240_i32 dim 1 : vector<8x256xf32>, i32 -> vector<8x256xf32>
    %cst_20 = arith.constant 0.000000e+00 : f32
    %45 = vector.broadcast %cst_20 : f32 to vector<8x256xf32>
    %46 = arith.select %18, %44, %45 : vector<8x256xi1>, vector<8x256xf32>
    %c239_i32 = arith.constant 239 : i32
    %47 = tpu.dynamic_rotate %8 by %c239_i32 dim 1 : vector<8x256xf32>, i32 -> vector<8x256xf32>
    %48 = arith.andi %18, %22 : vector<8x256xi1>
    %cst_21 = arith.constant 0.000000e+00 : f32
    %49 = vector.broadcast %cst_21 : f32 to vector<8x256xf32>
    %50 = arith.select %48, %47, %49 : vector<8x256xi1>, vector<8x256xf32>
    %51 = tpu.concatenate %26, %29, %33, %36, %8, %39, %43, %46, %50 in 0 : vector<8x256xf32>, vector<8x256xf32>, vector<8x256xf32>, vector<8x256xf32>, vector<8x256xf32>, vector<8x256xf32>, vector<8x256xf32>, vector<8x256xf32>, vector<8x256xf32> -> vector<72x256xf32>
    %c0_22 = arith.constant 0 : index
    %c0_23 = arith.constant 0 : index
    %52 = vector.load %arg6[%c0_22, %c0_23] : memref<3x72xf32, #tpu.memory_space<vmem>>, vector<3x72xf32>
    %cst_24 = arith.constant dense<0.000000e+00> : vector<3x256xf32>
    %53 = tpu.matmul %52, %51, %cst_24 {dimension_numbers = #tpu.dot_dimension_numbers<[1], [0], [0], [1], [0, 0, 1, 1], [], []>} : vector<3x72xf32>, vector<72x256xf32>, vector<3x256xf32> -> vector<3x256xf32>
    %c0_25 = arith.constant 0 : index
    %c0_26 = arith.constant 0 : index
    %54 = vector.load %arg7[%c0_25, %c0_26] : memref<3x1xf32, #tpu.memory_space<vmem>>, vector<3x1xf32>
    %55 = vector.broadcast %54 : vector<3x1xf32> to vector<3x256xf32>
    %56 = arith.addf %53, %55 : vector<3x256xf32>
    %cst_27 = arith.constant 0.000000e+00 : f32
    %57 = vector.broadcast %cst_27 : f32 to vector<3x256xf32>
    %58 = arith.maximumf %56, %57 : vector<3x256xf32>
    %c0_28 = arith.constant 0 : index
    %c0_29 = arith.constant 0 : index
    %59 = vector.load %arg8[%c0_28, %c0_29] : memref<3x3xf32, #tpu.memory_space<vmem>>, vector<3x3xf32>
    %cst_30 = arith.constant dense<0.000000e+00> : vector<3x256xf32>
    %60 = tpu.matmul %59, %58, %cst_30 {dimension_numbers = #tpu.dot_dimension_numbers<[1], [0], [0], [1], [0, 0, 1, 1], [], []>} : vector<3x3xf32>, vector<3x256xf32>, vector<3x256xf32> -> vector<3x256xf32>
    %c0_31 = arith.constant 0 : index
    %c0_32 = arith.constant 0 : index
    %61 = vector.load %arg9[%c0_31, %c0_32] : memref<3x1xf32, #tpu.memory_space<vmem>>, vector<3x1xf32>
    %62 = vector.broadcast %61 : vector<3x1xf32> to vector<3x256xf32>
    %63 = arith.addf %60, %62 : vector<3x256xf32>
    %64 = arith.addf %63, %1 : vector<3x256xf32>
    %cst_33 = arith.constant 0.000000e+00 : f32
    %65 = vector.broadcast %cst_33 : f32 to vector<3x256xf32>
    %66 = arith.maximumf %64, %65 : vector<3x256xf32>
    %c0_34 = arith.constant 0 : index
    %c0_35 = arith.constant 0 : index
    %c0_36 = arith.constant 0 : index
    %67 = vector.load %arg10[%c0_34, %c0_35, %c0_36] : memref<1x3x256xf32, #tpu.memory_space<vmem>>, vector<1x3x256xf32>
    %68 = vector.shape_cast %67 : vector<1x3x256xf32> to vector<3x256xf32>
    %69 = vector.shape_cast %66 : vector<3x256xf32> to vector<1x3x256xf32>
    tpu.vector_store %arg10[%c0_34, %c0_35, %c0_36], %69 {strides = array<i32>} : memref<1x3x256xf32, #tpu.memory_space<vmem>>, vector<1x3x256xf32>,
    return
  }
  func.func @transform_0(%arg0: i32) -> (i32, i32, i32) {
    %c0_i32 = arith.constant 0 : i32
    %c0_i32_0 = arith.constant 0 : i32
    %c0_i32_1 = arith.constant 0 : i32
    return %arg0, %c0_i32, %c0_i32_0 : i32, i32, i32
  }
  func.func @transform_1(%arg0: i32) -> (i32, i32) {
    %c0_i32 = arith.constant 0 : i32
    %c0_i32_0 = arith.constant 0 : i32
    %c0_i32_1 = arith.constant 0 : i32
    return %c0_i32, %c0_i32_0 : i32, i32
  }
  func.func @transform_2(%arg0: i32) -> (i32, i32) {
    %c0_i32 = arith.constant 0 : i32
    %c0_i32_0 = arith.constant 0 : i32
    %c0_i32_1 = arith.constant 0 : i32
    return %c0_i32, %c0_i32_0 : i32, i32
  }
  func.func @transform_3(%arg0: i32) -> (i32, i32) {
    %c0_i32 = arith.constant 0 : i32
    %c0_i32_0 = arith.constant 0 : i32
    %c0_i32_1 = arith.constant 0 : i32
    return %c0_i32, %c0_i32_0 : i32, i32
  }
  func.func @transform_4(%arg0: i32) -> (i32, i32) {
    %c0_i32 = arith.constant 0 : i32
    %c0_i32_0 = arith.constant 0 : i32
    %c0_i32_1 = arith.constant 0 : i32
    return %c0_i32, %c0_i32_0 : i32, i32
  }
  func.func @transform_5(%arg0: i32) -> (i32, i32) {
    %c0_i32 = arith.constant 0 : i32
    %c0_i32_0 = arith.constant 0 : i32
    %c0_i32_1 = arith.constant 0 : i32
    return %c0_i32, %c0_i32_0 : i32, i32
  }
  func.func @transform_6(%arg0: i32) -> (i32, i32) {
    %c0_i32 = arith.constant 0 : i32
    %c0_i32_0 = arith.constant 0 : i32
    %c0_i32_1 = arith.constant 0 : i32
    return %c0_i32, %c0_i32_0 : i32, i32
  }
  func.func @transform_7(%arg0: i32) -> (i32, i32) {
    %c0_i32 = arith.constant 0 : i32
    %c0_i32_0 = arith.constant 0 : i32
    %c0_i32_1 = arith.constant 0 : i32
    return %c0_i32, %c0_i32_0 : i32, i32
  }
  func.func @transform_8(%arg0: i32) -> (i32, i32) {
    %c0_i32 = arith.constant 0 : i32
    %c0_i32_0 = arith.constant 0 : i32
    %c0_i32_1 = arith.constant 0 : i32
    return %c0_i32, %c0_i32_0 : i32, i32
  }
  func.func @transform_9(%arg0: i32) -> (i32, i32, i32) {
    %c0_i32 = arith.constant 0 : i32
    %c0_i32_0 = arith.constant 0 : i32
    %c0_i32_1 = arith.constant 0 : i32
    return %arg0, %c0_i32, %c0_i32_0 : i32, i32, i32
  }
}

</mosaic_0001>

<llo_original>
// kernel: tpu_custom_call.1
$region0: #{tpu_custom_call.1}
  #allocation0 [shape = 'u32[]', space=smem, size = 0x4, offset = 0x4, fixed_abs, tag = 'smem constant byte address 0x4 - core index']
  #allocation1 [shape = 'u32[72,128]{1,0:T(1,128)}', space=vmem, size = 0x9000, scoped, tag = 'internal scratch']
  %s0 = inlined_call_operand.vmem [shape: f32[2,3,256], index: 0, kind: input, shape index: {}]
  %s1 = inlined_call_operand.vmem [shape: s32[1,256], index: 1, kind: input, shape index: {}]
  %s2 = inlined_call_operand.vmem [shape: s32[1,256], index: 2, kind: input, shape index: {}]
  %s3 = inlined_call_operand.vmem [shape: f32[8,3], index: 3, kind: input, shape index: {}]
  %s4 = inlined_call_operand.vmem [shape: f32[8,1], index: 4, kind: input, shape index: {}]
  %s5 = inlined_call_operand.vmem [shape: f32[3,72], index: 5, kind: input, shape index: {}]
  %s6 = inlined_call_operand.vmem [shape: f32[3,1], index: 6, kind: input, shape index: {}]
  %s7 = inlined_call_operand.vmem [shape: f32[3,3], index: 7, kind: input, shape index: {}]
  %s8 = inlined_call_operand.vmem [shape: f32[3,1], index: 8, kind: input, shape index: {}]
  %s9 = inlined_call_operand.vmem [shape: f32[2,3,256], index: 9, kind: output, shape index: {}]
  %s10 = sld [smem:[#allocation0]]
  $region69: #{tpu_custom_call.1} parent=0
    _
  %s12 = ssub.s32 1, %s10
  %s13 = scalar_select 0, %s12, %s10
  loop: start=0, step=1, limit=4
  $region2: #{tpu_custom_call.1} parent=0 // loop_pre_header
    _
  $region3: #{tpu_custom_call.1} parent=0 // loop_header
    %s15 = sphi 0, %s19
    %p16 = scmp.ge.s32.totalorder %s15, 4
    %s25 = sphi 0, %s27
    %s28 = sphi 0, %s25
    %s29 = sphi 0, %s28
    %s45 = sphi 0, %s29
    %s49 = sphi 0, %s49
    %s51 = sphi 0, %s49
    %s52 = sphi 0, %s51
    %s66 = sphi 0, %s52
    %s70 = sphi 0, %s70
    %s72 = sphi 0, %s70
    %s73 = sphi 0, %s72
    %s87 = sphi 0, %s73
    %s91 = sphi 0, %s91
    %s93 = sphi 0, %s91
    %s94 = sphi 0, %s93
    %s108 = sphi 0, %s94
    %s112 = sphi 0, %s112
    %s114 = sphi 0, %s112
    %s115 = sphi 0, %s114
    %s129 = sphi 0, %s115
    %s133 = sphi 0, %s133
    %s135 = sphi 0, %s133
    %s136 = sphi 0, %s135
    %s150 = sphi 0, %s136
    %s154 = sphi 0, %s154
    %s156 = sphi 0, %s154
    %s157 = sphi 0, %s156
    %s171 = sphi 0, %s157
    %s175 = sphi 0, %s175
    %s177 = sphi 0, %s175
    %s178 = sphi 0, %s177
    %s192 = sphi 0, %s178
    %s196 = sphi 0, %s196
    %s198 = sphi 0, %s196
    %s199 = sphi 0, %s198
    %s213 = sphi 0, %s199
    %s219 = sphi 0, %s221
    %s222 = sphi 0, %s219
    %s223 = sphi 0, %s222
    %s239 = sphi 0, %s223
  $region4: #{tpu_custom_call.1} parent=0 // loop_header_branch
    %18 = sbr.rel (%p16) target = $region8
  $region5: #{tpu_custom_call.1} parent=0 // loop_body
    %s20 = ssub.s32 %s15, 1
    %s21 = ssub.s32 %s15, 2
    %s22 = sadd.s32 %s15, 1
    %s23 = ssub.s32 %s15, %s22
    %p24 = scmp.eq.s32.totalorder %s23, 0
    %s26 = sadd.s32 %s25, 1
    %s27 = scalar_select %p24, %s25, %s26
    %p30 = pneg %p24
    %p31 = scmp.eq.s32.totalorder %s15, 1
    %p32 = por %p30, %p31
    %p33 = scmp.ne.s32.totalorder %s25, %s28
    %p34 = scmp.eq.s32.totalorder %s15, 0
    %p35 = por %p33, %p34
    %p36 = scmp.ne.s32.totalorder %s25, %s28
    %p37 = scmp.eq.s32.totalorder %s20, 1
    %p38 = por %p36, %p37
    %p39 = scmp.ne.s32.totalorder %s28, %s29
    %p40 = scmp.eq.s32.totalorder %s20, 0
    %p41 = por %p39, %p40
    %p42 = scmp.ne.s32.totalorder %s28, %s29
    %p43 = scmp.eq.s32.totalorder %s21, 1
    %p44 = por %p42, %p43
    %p46 = scmp.ne.s32.totalorder %s29, %s45
    %p47 = scmp.eq.s32.totalorder %s21, 0
    %p48 = por %p46, %p47
    %s50 = sadd.s32 %s49, 1
    %p53 = scmp.eq.s32.totalorder %s15, 1
    %p54 = scmp.ne.s32.totalorder %s49, %s51
    %p55 = scmp.eq.s32.totalorder %s15, 0
    %p56 = por %p54, %p55
    %p57 = scmp.ne.s32.totalorder %s49, %s51
    %p58 = scmp.eq.s32.totalorder %s20, 1
    %p59 = por %p57, %p58
    %p60 = scmp.ne.s32.totalorder %s51, %s52
    %p61 = scmp.eq.s32.totalorder %s20, 0
    %p62 = por %p60, %p61
    %p63 = scmp.ne.s32.totalorder %s51, %s52
    %p64 = scmp.eq.s32.totalorder %s21, 1
    %p65 = por %p63, %p64
    %p67 = scmp.ne.s32.totalorder %s52, %s66
    %p68 = scmp.eq.s32.totalorder %s21, 0
    %p69 = por %p67, %p68
    %s71 = sadd.s32 %s70, 1
    %p74 = scmp.eq.s32.totalorder %s15, 1
    %p75 = scmp.ne.s32.totalorder %s70, %s72
    %p76 = scmp.eq.s32.totalorder %s15, 0
    %p77 = por %p75, %p76
    %p78 = scmp.ne.s32.totalorder %s70, %s72
    %p79 = scmp.eq.s32.totalorder %s20, 1
    %p80 = por %p78, %p79
    %p81 = scmp.ne.s32.totalorder %s72, %s73
    %p82 = scmp.eq.s32.totalorder %s20, 0
    %p83 = por %p81, %p82
    %p84 = scmp.ne.s32.totalorder %s72, %s73
    %p85 = scmp.eq.s32.totalorder %s21, 1
    %p86 = por %p84, %p85
    %p88 = scmp.ne.s32.totalorder %s73, %s87
    %p89 = scmp.eq.s32.totalorder %s21, 0
    %p90 = por %p88, %p89
    %s92 = sadd.s32 %s91, 1
    %p95 = scmp.eq.s32.totalorder %s15, 1
    %p96 = scmp.ne.s32.totalorder %s91, %s93
    %p97 = scmp.eq.s32.totalorder %s15, 0
    %p98 = por %p96, %p97
    %p99 = scmp.ne.s32.totalorder %s91, %s93
    %p100 = scmp.eq.s32.totalorder %s20, 1
    %p101 = por %p99, %p100
    %p102 = scmp.ne.s32.totalorder %s93, %s94
    %p103 = scmp.eq.s32.totalorder %s20, 0
    %p104 = por %p102, %p103
    %p105 = scmp.ne.s32.totalorder %s93, %s94
    %p106 = scmp.eq.s32.totalorder %s21, 1
    %p107 = por %p105, %p106
    %p109 = scmp.ne.s32.totalorder %s94, %s108
    %p110 = scmp.eq.s32.totalorder %s21, 0
    %p111 = por %p109, %p110
    %s113 = sadd.s32 %s112, 1
    %p116 = scmp.eq.s32.totalorder %s15, 1
    %p117 = scmp.ne.s32.totalorder %s112, %s114
    %p118 = scmp.eq.s32.totalorder %s15, 0
    %p119 = por %p117, %p118
    %p120 = scmp.ne.s32.totalorder %s112, %s114
    %p121 = scmp.eq.s32.totalorder %s20, 1
    %p122 = por %p120, %p121
    %p123 = scmp.ne.s32.totalorder %s114, %s115
    %p124 = scmp.eq.s32.totalorder %s20, 0
    %p125 = por %p123, %p124
    %p126 = scmp.ne.s32.totalorder %s114, %s115
    %p127 = scmp.eq.s32.totalorder %s21, 1
    %p128 = por %p126, %p127
    %p130 = scmp.ne.s32.totalorder %s115, %s129
    %p131 = scmp.eq.s32.totalorder %s21, 0
    %p132 = por %p130, %p131
    %s134 = sadd.s32 %s133, 1
    %p137 = scmp.eq.s32.totalorder %s15, 1
    %p138 = scmp.ne.s32.totalorder %s133, %s135
    %p139 = scmp.eq.s32.totalorder %s15, 0
    %p140 = por %p138, %p139
    %p141 = scmp.ne.s32.totalorder %s133, %s135
    %p142 = scmp.eq.s32.totalorder %s20, 1
    %p143 = por %p141, %p142
    %p144 = scmp.ne.s32.totalorder %s135, %s136
    %p145 = scmp.eq.s32.totalorder %s20, 0
    %p146 = por %p144, %p145
    %p147 = scmp.ne.s32.totalorder %s135, %s136
    %p148 = scmp.eq.s32.totalorder %s21, 1
    %p149 = por %p147, %p148
    %p151 = scmp.ne.s32.totalorder %s136, %s150
    %p152 = scmp.eq.s32.totalorder %s21, 0
    %p153 = por %p151, %p152
    %s155 = sadd.s32 %s154, 1
    %p158 = scmp.eq.s32.totalorder %s15, 1
    %p159 = scmp.ne.s32.totalorder %s154, %s156
    %p160 = scmp.eq.s32.totalorder %s15, 0
    %p161 = por %p159, %p160
    %p162 = scmp.ne.s32.totalorder %s154, %s156
    %p163 = scmp.eq.s32.totalorder %s20, 1
    %p164 = por %p162, %p163
    %p165 = scmp.ne.s32.totalorder %s156, %s157
    %p166 = scmp.eq.s32.totalorder %s20, 0
    %p167 = por %p165, %p166
    %p168 = scmp.ne.s32.totalorder %s156, %s157
    %p169 = scmp.eq.s32.totalorder %s21, 1
    %p170 = por %p168, %p169
    %p172 = scmp.ne.s32.totalorder %s157, %s171
    %p173 = scmp.eq.s32.totalorder %s21, 0
    %p174 = por %p172, %p173
    %s176 = sadd.s32 %s175, 1
    %p179 = scmp.eq.s32.totalorder %s15, 1
    %p180 = scmp.ne.s32.totalorder %s175, %s177
    %p181 = scmp.eq.s32.totalorder %s15, 0
    %p182 = por %p180, %p181
    %p183 = scmp.ne.s32.totalorder %s175, %s177
    %p184 = scmp.eq.s32.totalorder %s20, 1
    %p185 = por %p183, %p184
    %p186 = scmp.ne.s32.totalorder %s177, %s178
    %p187 = scmp.eq.s32.totalorder %s20, 0
    %p188 = por %p186, %p187
    %p189 = scmp.ne.s32.totalorder %s177, %s178
    %p190 = scmp.eq.s32.totalorder %s21, 1
    %p191 = por %p189, %p190
    %p193 = scmp.ne.s32.totalorder %s178, %s192
    %p194 = scmp.eq.s32.totalorder %s21, 0
    %p195 = por %p193, %p194
    %s197 = sadd.s32 %s196, 1
    %p200 = scmp.eq.s32.totalorder %s15, 1
    %p201 = scmp.ne.s32.totalorder %s196, %s198
    %p202 = scmp.eq.s32.totalorder %s15, 0
    %p203 = por %p201, %p202
    %p204 = scmp.ne.s32.totalorder %s196, %s198
    %p205 = scmp.eq.s32.totalorder %s20, 1
    %p206 = por %p204, %p205
    %p207 = scmp.ne.s32.totalorder %s198, %s199
    %p208 = scmp.eq.s32.totalorder %s20, 0
    %p209 = por %p207, %p208
    %p210 = scmp.ne.s32.totalorder %s198, %s199
    %p211 = scmp.eq.s32.totalorder %s21, 1
    %p212 = por %p210, %p211
    %p214 = scmp.ne.s32.totalorder %s199, %s213
    %p215 = scmp.eq.s32.totalorder %s21, 0
    %p216 = por %p214, %p215
    %s217 = ssub.s32 %s15, %s22
    %p218 = scmp.eq.s32.totalorder %s217, 0
    %s220 = sadd.s32 %s219, 1
    %s221 = scalar_select %p218, %s219, %s220
    %p224 = pneg %p218
    %p225 = scmp.eq.s32.totalorder %s15, 1
    %p226 = por %p224, %p225
    %p227 = scmp.ne.s32.totalorder %s219, %s222
    %p228 = scmp.eq.s32.totalorder %s15, 0
    %p229 = por %p227, %p228
    %p230 = scmp.ne.s32.totalorder %s219, %s222
    %p231 = scmp.eq.s32.totalorder %s20, 1
    %p232 = por %p230, %p231
    %p233 = scmp.ne.s32.totalorder %s222, %s223
    %p234 = scmp.eq.s32.totalorder %s20, 0
    %p235 = por %p233, %p234
    %p236 = scmp.ne.s32.totalorder %s222, %s223
    %p237 = scmp.eq.s32.totalorder %s21, 1
    %p238 = por %p236, %p237
    %p240 = scmp.ne.s32.totalorder %s223, %s239
    %p241 = scmp.eq.s32.totalorder %s21, 0
    %p242 = por %p240, %p241
    %p243 = scmp.le.s32.totalorder 1, %s15
    %p244 = scmp.lt.s32.totalorder %s15, 3
    %p245 = pnand %p243, %p244
    %p246 = pneg %p245
    // Predicated region
    $region9: #{tpu_custom_call.1} parent=5 // pred_check
      _
    $region10: #{tpu_custom_call.1} parent=5 // pred_check_branch
      %248 = sbr.rel (%p245) target = $region12
    $region11: #{tpu_custom_call.1} parent=5 // pred_region
      %s249 = ssub.s32 %s15, 1
      // Predicated region
      $region13: #{tpu_custom_call.1} parent=11 // pred_check
        %p250 = pneg %p62
      $region14: #{tpu_custom_call.1} parent=11 // pred_check_branch
        %252 = sbr.rel (%p250) target = $region16
      $region15: #{tpu_custom_call.1} parent=11 // pred_region
        _
      $region16: #{tpu_custom_call.1} parent=11 // pred_fallthru
        _
      // Predicated region
      $region17: #{tpu_custom_call.1} parent=11 // pred_check
        %p253 = pneg %p83
      $region18: #{tpu_custom_call.1} parent=11 // pred_check_branch
        %255 = sbr.rel (%p253) target = $region20
      $region19: #{tpu_custom_call.1} parent=11 // pred_region
        _
      $region20: #{tpu_custom_call.1} parent=11 // pred_fallthru
        _
      // Predicated region
      $region21: #{tpu_custom_call.1} parent=11 // pred_check
        %p256 = pneg %p104
      $region22: #{tpu_custom_call.1} parent=11 // pred_check_branch
        %258 = sbr.rel (%p256) target = $region24
      $region23: #{tpu_custom_call.1} parent=11 // pred_region
        _
      $region24: #{tpu_custom_call.1} parent=11 // pred_fallthru
        _
      // Predicated region
      $region25: #{tpu_custom_call.1} parent=11 // pred_check
        %p259 = pneg %p125
      $region26: #{tpu_custom_call.1} parent=11 // pred_check_branch
        %261 = sbr.rel (%p259) target = $region28
      $region27: #{tpu_custom_call.1} parent=11 // pred_region
        _
      $region28: #{tpu_custom_call.1} parent=11 // pred_fallthru
        _
      // Predicated region
      $region29: #{tpu_custom_call.1} parent=11 // pred_check
        %p262 = pneg %p146
      $region30: #{tpu_custom_call.1} parent=11 // pred_check_branch
        %264 = sbr.rel (%p262) target = $region32
      $region31: #{tpu_custom_call.1} parent=11 // pred_region
        _
      $region32: #{tpu_custom_call.1} parent=11 // pred_fallthru
        _
      // Predicated region
      $region33: #{tpu_custom_call.1} parent=11 // pred_check
        %p265 = pneg %p167
      $region34: #{tpu_custom_call.1} parent=11 // pred_check_branch
        %267 = sbr.rel (%p265) target = $region36
      $region35: #{tpu_custom_call.1} parent=11 // pred_region
        _
      $region36: #{tpu_custom_call.1} parent=11 // pred_fallthru
        _
      // Predicated region
      $region37: #{tpu_custom_call.1} parent=11 // pred_check
        %p268 = pneg %p188
      $region38: #{tpu_custom_call.1} parent=11 // pred_check_branch
        %270 = sbr.rel (%p268) target = $region40
      $region39: #{tpu_custom_call.1} parent=11 // pred_region
        _
      $region40: #{tpu_custom_call.1} parent=11 // pred_fallthru
        _
      // Predicated region
      $region41: #{tpu_custom_call.1} parent=11 // pred_check
        %p271 = pneg %p209
      $region42: #{tpu_custom_call.1} parent=11 // pred_check_branch
        %273 = sbr.rel (%p271) target = $region44
      $region43: #{tpu_custom_call.1} parent=11 // pred_region
        _
      $region44: #{tpu_custom_call.1} parent=11 // pred_fallthru
        _
    $region12: #{tpu_custom_call.1} parent=5 // pred_fallthru
      _
    %p274 = scmp.lt.s32.totalorder %s15, 2
    // Predicated region
    $region45: #{tpu_custom_call.1} parent=5 // pred_check
      %p275 = pneg %p274
    $region46: #{tpu_custom_call.1} parent=5 // pred_check_branch
      %277 = sbr.rel (%p275) target = $region48
    $region47: #{tpu_custom_call.1} parent=5 // pred_region
      // Predicated region
      $region49: #{tpu_custom_call.1} parent=47 // pred_check
        %p278 = pneg %p35
      $region50: #{tpu_custom_call.1} parent=47 // pred_check_branch
        %280 = sbr.rel (%p278) target = $region52
      $region51: #{tpu_custom_call.1} parent=47 // pred_region
        %p281 = scmp.lt.s32.totalorder %s15, 1
        %s282 = scalar_select %p281, %s15, 1
        %s283 = smul.addr %s282, 2
        %s284 = smul.addr %s283, 4
        %s285 = scalar_lea.vmem %s0, %s284
      $region52: #{tpu_custom_call.1} parent=47 // pred_fallthru
        _
    $region48: #{tpu_custom_call.1} parent=5 // pred_fallthru
      _
    %p286 = scmp.le.s32.totalorder 1, %s15
    %p287 = scmp.lt.s32.totalorder %s15, 3
    %p288 = pnand %p286, %p287
    %p289 = pneg %p288
    // Predicated region
    $region53: #{tpu_custom_call.1} parent=5 // pred_check
      _
    $region54: #{tpu_custom_call.1} parent=5 // pred_check_branch
      %291 = sbr.rel (%p288) target = $region56
    $region55: #{tpu_custom_call.1} parent=5 // pred_region
      %s292 = ssub.s32 %s15, 1
      %p293 = scmp.lt.s32.totalorder %s20, 1
      %s294 = scalar_select %p293, %s20, 1
      %s295 = smul.addr %s294, 2
      %s296 = smul.addr %s295, 4
      %s297 = scalar_lea.vmem %s0, %s296
      %p298 = pneg %p41
      %p299 = pneg %p38
      %p300 = pneg %p62
      %p301 = pneg %p59
      %p302 = pneg %p83
      %p303 = pneg %p80
      %p304 = pneg %p104
      %p305 = pneg %p101
      %p306 = pneg %p125
      %p307 = pneg %p122
      %p308 = pneg %p146
      %p309 = pneg %p143
      %p310 = pneg %p167
      %p311 = pneg %p164
      %p312 = pneg %p188
      %p313 = pneg %p185
      %p314 = pneg %p209
      %p315 = pneg %p206
      %p316 = pneg %p235
      %p317 = pneg %p232
      %p318 = scmp.lt.s32.totalorder %s20, 1
      %s319 = scalar_select %p318, %s20, 1
      %s320 = smul.addr %s319, 2
      %s321 = smul.addr %s320, 4
      %s322 = scalar_lea.vmem %s9, %s321
      %p323 = scmp.lt.s32.totalorder %s20, 1
      %s324 = scalar_select %p323, %s20, 1
      %s325 = smul.addr %s324, 2
      %s326 = smul.addr %s325, 4
      %s327 = scalar_lea.vmem %s0, %s326
      %p328 = scmp.lt.s32.totalorder %s20, 1
      %s329 = scalar_select %p328, %s20, 1
      %s330 = smul.addr %s329, 2
      %s331 = smul.addr %s330, 4
      %s332 = scalar_lea.vmem %s9, %s331
      %v333 = vld [vmem:[%s327] sm:$0x77]
      %v334 = vld [vmem:[%s3] sm:$0xff]
      %v335 = vld [vmem:[%s4] sm:$0xff]
      %337 = vset.pattern.permute.xlu0 0
      %338 = vperm.xlu0 %337, %v335
      %v339 = vpop.permute.xlu0 %338
      %342 = vst [vmem:[#allocation1] ss:$2 sm:$0xff] %v333
      %v343 = vld.sshfl [vmem:[#allocation1] sm:$0xff pattern:$0x75316420]
      %v344 = vld.sshfl [vmem:[#allocation1 + $0x8] sm:$0xff pattern:$0x75316420]
      %vm345 = vcmask 23552
      %v347 = vsel %vm345, %v334, 0
      %vm349 = vcmask 1042432
      %v350 = vsel %vm349, %v343, 0
      %v352 = vsel %vm349, %v344, 0
      %354 = vmatpush.msra.mxu0 0.0
      %355 = vmatpush.msra.mxu0 0.0
      %356 = vmatpush.msra.mxu0 0.0
      %357 = vmatpush.msra.mxu0 0.0
      %358 = vmatpush.msra.mxu0 0.0
      %359 = vmatpush.msra.mxu0 0.0
      %360 = vmatpush.msra.mxu0 0.0
      %361 = vmatpush.msra.mxu0 0.0
      %362 = vmatpush.msra.mxu0 0.0
      %363 = vmatpush.msra.mxu0 0.0
      %364 = vmatpush.msra.mxu0 0.0
      %365 = vmatpush.msra.mxu0 0.0
      %366 = vmatpush.msra.mxu0 0.0
      %367 = vmatpush.msra.mxu0 0.0
      %368 = vmatpush.msra.mxu0 0.0
      %369 = vmatpush.msra.mxu0 %v350
      %370 = vmatmul.f32.gmra.mxu0 %v347
      %v371 = vpop.f32.mrf.mxu0
      %v372 = vadd.f32 %v339, %v371
      %373 = vdwg.mxu0
      %374 = vmatpush.msra.mxu0 0.0
      %375 = vmatpush.msra.mxu0 0.0
      %376 = vmatpush.msra.mxu0 0.0
      %377 = vmatpush.msra.mxu0 0.0
      %378 = vmatpush.msra.mxu0 0.0
      %379 = vmatpush.msra.mxu0 0.0
      %380 = vmatpush.msra.mxu0 0.0
      %381 = vmatpush.msra.mxu0 0.0
      %382 = vmatpush.msra.mxu0 0.0
      %383 = vmatpush.msra.mxu0 0.0
      %384 = vmatpush.msra.mxu0 0.0
      %385 = vmatpush.msra.mxu0 0.0
      %386 = vmatpush.msra.mxu0 0.0
      %387 = vmatpush.msra.mxu0 0.0
      %388 = vmatpush.msra.mxu0 0.0
      %389 = vmatpush.msra.mxu0 %v352
      %390 = vmatmul.f32.gmra.mxu0 %v347
      %v391 = vpop.f32.mrf.mxu0
      %v392 = vadd.f32 %v339, %v391
      %393 = vdwg.mxu0
      %v394 = vmax.f32 %v372, 0.0
      %v395 = vmax.f32 %v392, 0.0
      %v396 = vld [vmem:[%s1] sm:$0x3]
      %v397 = vperm.slane %v396, 0
      %v398 = vperm.slane %v396, 1
      %v399 = vld [vmem:[%s2] sm:$0x3]
      %v400 = vperm.slane %v399, 0
      %v401 = vperm.slane %v399, 1
      %vm402 = vcmp.ge.s32.totalorder %v397, 1
      %vm403 = vcmp.ge.s32.totalorder %v398, 1
      %vm404 = vcmp.le.s32.totalorder %v397, 14
      %vm405 = vcmp.le.s32.totalorder %v398, 14
      %vm406 = vcmp.ge.s32.totalorder %v400, 1
      %vm407 = vcmp.ge.s32.totalorder %v401, 1
      %vm408 = vcmp.le.s32.totalorder %v400, 14
      %vm409 = vcmp.le.s32.totalorder %v401, 14
      %410 = vrot.lane.b32.xlu0 %v394, 17
      %v411 = vpop.permute.xlu0 %410
      %412 = vrot.lane.b32.xlu0 %v395, 17
      %v413 = vpop.permute.xlu0 %412
      %v414 = vlaneseq
      %v415 = vand.u32 %v414, 127
      %vm416 = vcmp.lt.s32.totalorder %v415, 17
      %v417 = vsel %vm416, %v411, %v413
      %v418 = vsel %vm416, %v413, %v411
      %vm419 = vmand %vm402, %vm406
      %vm420 = vmand %vm403, %vm407
      %v421 = vsel %vm419, %v418, 0.0
      %v422 = vsel %vm420, %v417, 0.0
      %423 = vrot.lane.b32.xlu0 %v394, 16
      %v424 = vpop.permute.xlu0 %423
      %425 = vrot.lane.b32.xlu0 %v395, 16
      %v426 = vpop.permute.xlu0 %425
      %vm427 = vcmp.lt.s32.totalorder %v415, 16
      %v428 = vsel %vm427, %v424, %v426
      %v429 = vsel %vm427, %v426, %v424
      %v430 = vsel %vm402, %v429, 0.0
      %v431 = vsel %vm403, %v428, 0.0
      %432 = vrot.lane.b32.xlu0 %v394, 15
      %v433 = vpop.permute.xlu0 %432
      %434 = vrot.lane.b32.xlu0 %v395, 15
      %v435 = vpop.permute.xlu0 %434
      %vm436 = vcmp.lt.s32.totalorder %v415, 15
      %v437 = vsel %vm436, %v433, %v435
      %v438 = vsel %vm436, %v435, %v433
      %vm439 = vmand %vm402, %vm408
      %vm440 = vmand %vm403, %vm409
      %v441 = vsel %vm439, %v438, 0.0
      %v442 = vsel %vm440, %v437, 0.0
      %443 = vrot.lane.b32.xlu0 %v394, 1
      %v444 = vpop.permute.xlu0 %443
      %445 = vrot.lane.b32.xlu0 %v395, 1
      %v446 = vpop.permute.xlu0 %445
      %vm447 = vcmp.lt.s32.totalorder %v415, 1
      %v448 = vsel %vm447, %v444, %v446
      %v449 = vsel %vm447, %v446, %v444
      %v450 = vsel %vm406, %v449, 0.0
      %v451 = vsel %vm407, %v448, 0.0
      %452 = vrot.lane.b32.xlu0 %v394, 127
      %v453 = vpop.permute.xlu0 %452
      %454 = vrot.lane.b32.xlu0 %v395, 127
      %v455 = vpop.permute.xlu0 %454
      %vm456 = vcmp.lt.s32.totalorder %v415, 127
      %v457 = vsel %vm456, %v453, %v455
      %v458 = vsel %vm456, %v455, %v453
      %v459 = vsel %vm408, %v457, 0.0
      %v460 = vsel %vm409, %v458, 0.0
      %461 = vrot.lane.b32.xlu0 %v394, 113
      %v462 = vpop.permute.xlu0 %461
      %463 = vrot.lane.b32.xlu0 %v395, 113
      %v464 = vpop.permute.xlu0 %463
      %vm465 = vcmp.lt.s32.totalorder %v415, 113
      %v466 = vsel %vm465, %v462, %v464
      %v467 = vsel %vm465, %v464, %v462
      %vm468 = vmand %vm404, %vm406
      %vm469 = vmand %vm405, %vm407
      %v470 = vsel %vm468, %v466, 0.0
      %v471 = vsel %vm469, %v467, 0.0
      %472 = vrot.lane.b32.xlu0 %v394, 112
      %v473 = vpop.permute.xlu0 %472
      %474 = vrot.lane.b32.xlu0 %v395, 112
      %v475 = vpop.permute.xlu0 %474
      %vm476 = vcmp.lt.s32.totalorder %v415, 112
      %v477 = vsel %vm476, %v473, %v475
      %v478 = vsel %vm476, %v475, %v473
      %v479 = vsel %vm404, %v477, 0.0
      %v480 = vsel %vm405, %v478, 0.0
      %481 = vrot.lane.b32.xlu0 %v394, 111
      %v482 = vpop.permute.xlu0 %481
      %483 = vrot.lane.b32.xlu0 %v395, 111
      %v484 = vpop.permute.xlu0 %483
      %vm485 = vcmp.lt.s32.totalorder %v415, 111
      %v486 = vsel %vm485, %v482, %v484
      %v487 = vsel %vm485, %v484, %v482
      %vm488 = vmand %vm404, %vm408
      %vm489 = vmand %vm405, %vm409
      %v490 = vsel %vm488, %v486, 0.0
      %v491 = vsel %vm489, %v487, 0.0
      %v492 = vld [vmem:[%s5] sm:$0x7]
      %v493 = vld [vmem:[%s6] sm:$0x7]
      %495 = vset.pattern.permute.xlu0 0
      %496 = vperm.xlu0 %495, %v493
      %v497 = vpop.permute.xlu0 %496
      %vm499 = vcmask 588800
      %v501 = vsel %vm499, %v492, 0
      %503 = vmatpush.msra.mxu0 0.0
      %504 = vmatpush.msra.mxu0 0.0
      %505 = vmatpush.msra.mxu0 0.0
      %506 = vmatpush.msra.mxu0 0.0
      %507 = vmatpush.msra.mxu0 0.0
      %508 = vmatpush.msra.mxu0 0.0
      %509 = vmatpush.msra.mxu0 0.0
      %510 = vmatpush.msra.mxu0 %v490
      %511 = vmatpush.msra.mxu0 %v479
      %512 = vmatpush.msra.mxu0 %v470
      %513 = vmatpush.msra.mxu0 %v459
      %514 = vmatpush.msra.mxu0 %v394
      %515 = vmatpush.msra.mxu0 %v450
      %516 = vmatpush.msra.mxu0 %v441
      %517 = vmatpush.msra.mxu0 %v430
      %518 = vmatpush.msra.mxu0 %v421
      %519 = vmatmul.f32.gmra.mxu0 %v501
      %v520 = vpop.f32.mrf.mxu0
      %v521 = vadd.f32 %v497, %v520
      %522 = vdwg.mxu0
      %523 = vmatpush.msra.mxu0 0.0
      %524 = vmatpush.msra.mxu0 0.0
      %525 = vmatpush.msra.mxu0 0.0
      %526 = vmatpush.msra.mxu0 0.0
      %527 = vmatpush.msra.mxu0 0.0
      %528 = vmatpush.msra.mxu0 0.0
      %529 = vmatpush.msra.mxu0 0.0
      %530 = vmatpush.msra.mxu0 %v491
      %531 = vmatpush.msra.mxu0 %v480
      %532 = vmatpush.msra.mxu0 %v471
      %533 = vmatpush.msra.mxu0 %v460
      %534 = vmatpush.msra.mxu0 %v395
      %535 = vmatpush.msra.mxu0 %v451
      %536 = vmatpush.msra.mxu0 %v442
      %537 = vmatpush.msra.mxu0 %v431
      %538 = vmatpush.msra.mxu0 %v422
      %539 = vmatmul.f32.gmra.mxu0 %v501
      %v540 = vpop.f32.mrf.mxu0
      %v541 = vadd.f32 %v497, %v540
      %542 = vdwg.mxu0
      %v543 = vmax.f32 %v521, 0.0
      %v544 = vmax.f32 %v541, 0.0
      %v545 = vld [vmem:[%s7] sm:$0x7]
      %v546 = vld [vmem:[%s8] sm:$0x7]
      %548 = vset.pattern.permute.xlu0 0
      %549 = vperm.xlu0 %548, %v546
      %v550 = vpop.permute.xlu0 %549
      %v553 = vsel %vm345, %v545, 0
      %v556 = vsel %vm349, %v543, 0
      %v559 = vsel %vm349, %v544, 0
      %561 = vmatpush.msra.mxu0 0.0
      %562 = vmatpush.msra.mxu0 0.0
      %563 = vmatpush.msra.mxu0 0.0
      %564 = vmatpush.msra.mxu0 0.0
      %565 = vmatpush.msra.mxu0 0.0
      %566 = vmatpush.msra.mxu0 0.0
      %567 = vmatpush.msra.mxu0 0.0
      %568 = vmatpush.msra.mxu0 0.0
      %569 = vmatpush.msra.mxu0 0.0
      %570 = vmatpush.msra.mxu0 0.0
      %571 = vmatpush.msra.mxu0 0.0
      %572 = vmatpush.msra.mxu0 0.0
      %573 = vmatpush.msra.mxu0 0.0
      %574 = vmatpush.msra.mxu0 0.0
      %575 = vmatpush.msra.mxu0 0.0
      %576 = vmatpush.msra.mxu0 %v556
      %577 = vmatmul.f32.gmra.mxu0 %v553
      %v578 = vpop.f32.mrf.mxu0
      %v579 = vadd.f32 %v550, %v578
      %580 = vdwg.mxu0
      %581 = vmatpush.msra.mxu0 0.0
      %582 = vmatpush.msra.mxu0 0.0
      %583 = vmatpush.msra.mxu0 0.0
      %584 = vmatpush.msra.mxu0 0.0
      %585 = vmatpush.msra.mxu0 0.0
      %586 = vmatpush.msra.mxu0 0.0
      %587 = vmatpush.msra.mxu0 0.0
      %588 = vmatpush.msra.mxu0 0.0
      %589 = vmatpush.msra.mxu0 0.0
      %590 = vmatpush.msra.mxu0 0.0
      %591 = vmatpush.msra.mxu0 0.0
      %592 = vmatpush.msra.mxu0 0.0
      %593 = vmatpush.msra.mxu0 0.0
      %594 = vmatpush.msra.mxu0 0.0
      %595 = vmatpush.msra.mxu0 0.0
      %596 = vmatpush.msra.mxu0 %v559
      %597 = vmatmul.f32.gmra.mxu0 %v553
      %v598 = vpop.f32.mrf.mxu0
      %v599 = vadd.f32 %v550, %v598
      %600 = vdwg.mxu0
      %601 = vst [vmem:[#allocation1] ss:$2 sm:$0xff] %v333
      %v602 = vld.sshfl [vmem:[#allocation1] sm:$0xff pattern:$0x75316420]
      %v603 = vld.sshfl [vmem:[#allocation1 + $0x8] sm:$0xff pattern:$0x75316420]
      %v606 = vadd.f32 %v579, %v602
      %v607 = vadd.f32 %v599, %v603
      %v608 = vmax.f32 %v606, 0.0
      %v609 = vmax.f32 %v607, 0.0
      %v612 = vrot.slane %v609, 4
      %vm613 = vcmask 1043456
      %v614 = vsel %vm613, %v608, %v612
      %616 = vst [vmem:[%s332] sm:$0x77] %v614
      %p617 = scmp.lt.s32.totalorder %s20, 1
      %s618 = scalar_select %p617, %s20, 1
      %s619 = smul.addr %s618, 2
      %s620 = smul.addr %s619, 4
      %s621 = scalar_lea.vmem %s9, %s620
      // Predicated region
      $region57: #{tpu_custom_call.1} parent=55 // pred_check
        %p622 = pneg %p232
      $region58: #{tpu_custom_call.1} parent=55 // pred_check_branch
        %624 = sbr.rel (%p622) target = $region60
      $region59: #{tpu_custom_call.1} parent=55 // pred_region
        _
      $region60: #{tpu_custom_call.1} parent=55 // pred_fallthru
        _
    $region56: #{tpu_custom_call.1} parent=5 // pred_fallthru
      _
    %p625 = scmp.le.s32.totalorder 2, %s15
    // Predicated region
    $region61: #{tpu_custom_call.1} parent=5 // pred_check
      %p626 = pneg %p625
    $region62: #{tpu_custom_call.1} parent=5 // pred_check_branch
      %628 = sbr.rel (%p626) target = $region64
    $region63: #{tpu_custom_call.1} parent=5 // pred_region
      %s629 = ssub.s32 %s15, 2
      // Predicated region
      $region65: #{tpu_custom_call.1} parent=63 // pred_check
        %p630 = pneg %p238
      $region66: #{tpu_custom_call.1} parent=63 // pred_check_branch
        %632 = sbr.rel (%p630) target = $region68
      $region67: #{tpu_custom_call.1} parent=63 // pred_region
        %p633 = scmp.lt.s32.totalorder %s21, 1
        %s634 = scalar_select %p633, %s21, 1
        %s635 = smul.addr %s634, 2
        %s636 = smul.addr %s635, 4
        %s637 = scalar_lea.vmem %s9, %s636
      $region68: #{tpu_custom_call.1} parent=63 // pred_fallthru
        _
    $region64: #{tpu_custom_call.1} parent=5 // pred_fallthru
      _
  $region6: #{tpu_custom_call.1} parent=0 // loop_footer
    %s19 = sadd.s32 1, %s15
  $region7: #{tpu_custom_call.1} parent=0 // loop_footer_branch
    %14 = sbr.rel target = $region3
  $region8: #{tpu_custom_call.1} parent=0 // loop_exit
    _

</llo_original>
